<compile_context>
chip_gen: v5e
topology: v5e:2x2
jax: 0.10.0
libtpu: 0.0.40
codegen_flags: <defaults>
</compile_context>

<pallas_src>
import math
from functools import partial

import jax
import jax.numpy as jnp
from jax.experimental import pallas as pl
from jax.experimental.pallas import tpu as pltpu


def _build_pe(max_len: int, dim: int, dtype=jnp.float32) -> jnp.ndarray:
    """Deterministic sinusoidal positional-encoding buffer, shape (max_len, dim)."""
    position = jnp.arange(0, max_len, dtype=jnp.float32)[:, None]            # (L, 1)
    div_term = jnp.exp(
        jnp.arange(0, dim, 2, dtype=jnp.float32) * (-math.log(10000.0) / dim)
    )                                                                         # (ceil(D/2),)
    angles = position * div_term                                              # (L, ceil(D/2))
    pe = jnp.zeros((max_len, dim), dtype=jnp.float32)
    pe = pe.at[:, 0::2].set(jnp.sin(angles))
    n_odd = pe[:, 1::2].shape[1]                                              # D // 2
    pe = pe.at[:, 1::2].set(jnp.cos(angles)[:, :n_odd])
    return pe.astype(dtype)


def _add_pe_kernel(x_ref, pe_ref, o_ref):
    # x_ref/o_ref: (tile_rows, S*D) row tile of the flattened input;
    # pe_ref: (tile_rows, S*D), VMEM-resident. Single 2-D vadd, no broadcast.
    o_ref[...] = x_ref[...] + pe_ref[...]


# Minimum second-minor (sublane) block multiple per element size.
_SUBLANE = {4: 8, 2: 16, 1: 32}
# Working-set budget: ~5 tile-sized buffers (2x in, 2x out double-buffered + pe)
# must fit the smallest scoped-VMEM default (v5e: 16 MiB) with headroom and is
# tiny relative to v7x's 64 MiB physical VMEM -> no vmem_limit_bytes needed.
_VMEM_BUDGET_BYTES = 8 << 20


def _choose_tile_rows(n_rows: int, row_bytes: int, itemsize: int) -> int:
    """Largest sublane-aligned row tile (<= n_rows) that fits the VMEM budget."""
    base = _SUBLANE.get(itemsize, 8)
    if n_rows <= base:
        return n_rows                                    # full-extent block is legal
    budget_rows = max(base, _VMEM_BUDGET_BYTES // (5 * row_bytes))
    tile = (budget_rows // base) * base
    tile = min(tile, (n_rows // base) * base)            # never exceed the array
    return max(tile, base)


def positional_encoding_forward(
    x: jnp.ndarray,
    pe: jnp.ndarray,
    *,
    tile_rows: int | None = None,
    min_pallas_bytes: int = 256 * 1024,
) -> jnp.ndarray:
    """x: (B, S, D); pe: (max_len, D) with S <= max_len. Returns x + pe[:S]."""
    B, S, D = x.shape
    pe_s = pe[:S, :].astype(x.dtype)          # slice + unify dtype (no in-kernel cast)

    # Tiny inputs: a fused XLA add beats pallas_call launch + pipeline setup.
    if x.size * x.dtype.itemsize < min_pallas_bytes:
        return x + pe_s[None, :, :]

    row = S * D
    x2 = x.reshape(B, row)                    # free view of contiguous (B, S, D)
    pe_row = pe_s.reshape(1, row)             # one full pe period per flattened row

    itemsize = x.dtype.itemsize
    row_bytes = row * itemsize
    if tile_rows is None:
        tile_rows = _choose_tile_rows(B, row_bytes, itemsize)
    base = _SUBLANE.get(itemsize, 8)
    assert tile_rows == B or tile_rows % base == 0, (
        f"tile_rows={tile_rows} must be a multiple of the sublane quantum "
        f"({base}) or equal the batch size ({B})")

    # pe replicated to one full row tile; constant block index -> fetched once
    # and kept VMEM-resident for every grid step.
    pe_tile = jnp.tile(pe_row, (tile_rows, 1))        # (tile_rows, S*D)

    grid = (pl.cdiv(B, tile_rows),)                   # partial final tile is masked

    out2 = pl.pallas_call(
        _add_pe_kernel,
        out_shape=jax.ShapeDtypeStruct((B, row), x.dtype),
        grid_spec=pltpu.PrefetchScalarGridSpec(
            num_scalar_prefetch=0,
            grid=grid,
            in_specs=[
                pl.BlockSpec((tile_rows, row), lambda i: (i, 0)),   # row tile of x
                pl.BlockSpec((tile_rows, row), lambda i: (0, 0)),   # resident pe tile
            ],
            out_specs=pl.BlockSpec((tile_rows, row), lambda i: (i, 0)),
        ),
        compiler_params=pltpu.CompilerParams(
            # "parallel" lets v7x's two TensorCores split the row tiles;
            # measured-neutral on single-TC v5e/v6e.
            dimension_semantics=("parallel",),
        ),
    )(x2, pe_tile)

    return out2.reshape(B, S, D)


if __name__ == "__main__":
    MAX_LEN, DIM = 4, 65
    B, S = 2, 4  # seq length <= max_len, as the module's forward requires

    key = jax.random.PRNGKey(0)
    pe = _build_pe(MAX_LEN, DIM)

    # 1) Module-sized input. min_pallas_bytes=0 forces the Pallas path so the
    #    kernel itself is exercised; jit fuses the wrapper-side reshape/tile.
    fwd = jax.jit(partial(positional_encoding_forward, min_pallas_bytes=0))
    x = jax.random.normal(key, (B, S, DIM), dtype=jnp.float32)
    out = jax.block_until_ready(fwd(x, pe))
    ref = x + pe[None, :S, :]
    assert out.shape == (B, S, DIM)
    assert jnp.allclose(out, ref, atol=1e-6), "mismatch vs reference (small)"

    # 2) Larger batch with an explicit small tile: multi-step grid
    #    (ceil(50/16) = 4 tiles, last one partial) exercising the tiled path.
    B2 = 50
    fwd_tiled = jax.jit(
        partial(positional_encoding_forward, tile_rows=16, min_pallas_bytes=0))
    x_big = jax.random.normal(jax.random.PRNGKey(0), (B2, S, DIM), dtype=jnp.float32)
    out_big = jax.block_until_ready(fwd_tiled(x_big, pe))
    ref_big = x_big + pe[None, :S, :]
    assert jnp.allclose(out_big, ref_big, atol=1e-6), "mismatch vs reference (tiled)"

    print("KERNEL_OK")
</pallas_src>

<mosaic_0001>
module attributes {stable_mosaic.version = 11 : i64} {
  func.func @_add_pe_kernel(%arg0: i32, %arg1: memref<2x260xf32, #tpu.memory_space<vmem>>, %arg2: memref<2x260xf32, #tpu.memory_space<vmem>>, %arg3: memref<2x260xf32, #tpu.memory_space<vmem>>) attributes {dimension_semantics = [#tpu.dimension_semantics<parallel>], iteration_bounds = array<i64: 1>, scalar_prefetch = 0 : i64, scratch_operands = 0 : i64, tpu.core_type = #tpu.core_type<tc>, window_params = [{transform_indices = @transform_0, window_bounds = array<i64: 2, 260>}, {pipeline_mode = #tpu.pipeline_mode<synchronous>, transform_indices = @transform_1, window_bounds = array<i64: 2, 260>}, {transform_indices = @transform_2, window_bounds = array<i64: 2, 260>}]} {
    %c0 = arith.constant 0 : index
    %c0_0 = arith.constant 0 : index
    %0 = vector.load %arg1[%c0, %c0_0] : memref<2x260xf32, #tpu.memory_space<vmem>>, vector<2x260xf32>
    %c0_1 = arith.constant 0 : index
    %c0_2 = arith.constant 0 : index
    %1 = vector.load %arg2[%c0_1, %c0_2] : memref<2x260xf32, #tpu.memory_space<vmem>>, vector<2x260xf32>
    %2 = arith.addf %0, %1 : vector<2x260xf32>
    %c0_3 = arith.constant 0 : index
    %c0_4 = arith.constant 0 : index
    %3 = vector.load %arg3[%c0_3, %c0_4] : memref<2x260xf32, #tpu.memory_space<vmem>>, vector<2x260xf32>
    tpu.vector_store %arg3[%c0_3, %c0_4], %2 {strides = array<i32>} : memref<2x260xf32, #tpu.memory_space<vmem>>, vector<2x260xf32>,
    return
  }
  func.func @transform_0(%arg0: i32) -> (i32, i32) {
    %c0_i32 = arith.constant 0 : i32
    %c0_i32_0 = arith.constant 0 : i32
    return %arg0, %c0_i32 : i32, i32
  }
  func.func @transform_1(%arg0: i32) -> (i32, i32) {
    %c0_i32 = arith.constant 0 : i32
    %c0_i32_0 = arith.constant 0 : i32
    %c0_i32_1 = arith.constant 0 : i32
    return %c0_i32, %c0_i32_0 : i32, i32
  }
  func.func @transform_2(%arg0: i32) -> (i32, i32) {
    %c0_i32 = arith.constant 0 : i32
    %c0_i32_0 = arith.constant 0 : i32
    return %arg0, %c0_i32 : i32, i32
  }
}

</mosaic_0001>

<llo_original>
// kernel: positional_encoding_forward.1
$region0: #{positional_encoding_forward.1}
  #allocation0 [shape = 'u32[]', space=smem, size = 0x4, offset = 0x4, fixed_abs, tag = 'smem constant byte address 0x4 - core index']
  #allocation1 [shape = 'u32[72,128]{1,0:T(1,128)}', space=vmem, size = 0x9000, scoped, tag = 'internal scratch']
  %s0 = inlined_call_operand.vmem [shape: f32[2,260], index: 0, kind: input, shape index: {}]
  %s1 = inlined_call_operand.vmem [shape: f32[2,260], index: 1, kind: input, shape index: {}]
  %s2 = inlined_call_operand.vmem [shape: f32[2,260], index: 2, kind: output, shape index: {}]
  %s3 = sld [smem:[#allocation0]]
  $region18: #{positional_encoding_forward.1} parent=0
    _
  %s5 = ssub.s32 1, %s3
  %s6 = scalar_select 0, %s5, %s3
  // Predicated region
  $region2: #{positional_encoding_forward.1} parent=0 // pred_check
    _
  $region3: #{positional_encoding_forward.1} parent=0 // pred_check_branch
    %8 = sbr.rel (0) target = $region5
  $region4: #{positional_encoding_forward.1} parent=0 // pred_region
    _
  $region5: #{positional_encoding_forward.1} parent=0 // pred_fallthru
    _
  // Predicated region
  $region6: #{positional_encoding_forward.1} parent=0 // pred_check
    _
  $region7: #{positional_encoding_forward.1} parent=0 // pred_check_branch
    %10 = sbr.rel (0) target = $region9
  $region8: #{positional_encoding_forward.1} parent=0 // pred_region
    _
  $region9: #{positional_encoding_forward.1} parent=0 // pred_fallthru
    _
  %v11 = vld [vmem:[%s0] sm:$0x3f]
  %v12 = vld [vmem:[%s1] sm:$0x3f]
  %v13 = vadd.f32 %v11, %v12
  %vm14 = vcmask 1041408
  %vm15 = vcmask 1043458
  %vm16 = vmor %vm15, %vm14
  %vm17 = vcmask 29700
  %vm18 = vmor %vm17, %vm16
  %19 = vst.msk [vmem:[%s2] sm:$0x3f] %vm18, %v13
  // Predicated region
  $region10: #{positional_encoding_forward.1} parent=0 // pred_check
    _
  $region11: #{positional_encoding_forward.1} parent=0 // pred_check_branch
    %21 = sbr.rel (0) target = $region13
  $region12: #{positional_encoding_forward.1} parent=0 // pred_region
    _
  $region13: #{positional_encoding_forward.1} parent=0 // pred_fallthru
    _
  // Predicated region
  $region14: #{positional_encoding_forward.1} parent=0 // pred_check
    _
  $region15: #{positional_encoding_forward.1} parent=0 // pred_check_branch
    %23 = sbr.rel (0) target = $region17
  $region16: #{positional_encoding_forward.1} parent=0 // pred_region
    _
  $region17: #{positional_encoding_forward.1} parent=0 // pred_fallthru
    _

</llo_original>
